<compile_context>
chip_gen: v7x
topology: tpu7x:2x2x1
jax: 0.10.0
libtpu: 0.0.40
codegen_flags: <defaults>
</compile_context>

<pallas_src>
import functools

import jax
import jax.numpy as jnp
from jax.experimental import pallas as pl
from jax.experimental.pallas import tpu as pltpu


def _transition_kernel(x_ref, scale_ref, bias_ref, w_ref, out_ref, *, cin):
    # x_ref:      (bm, 4*Cin)  rows = pooled output pixels; columns are the four
    #                          2x2 window taps laid out as contiguous Cin groups:
    #                          [ (dy0,dx0) | (dy0,dx1) | (dy1,dx0) | (dy1,dx1) ]
    # scale/bias: (1, 4*Cin)   eval-mode BatchNorm affine, tiled 4x to match cols
    # w_ref:      (Cin, Cout)  1x1 conv weight (bf16 on the fast path)
    # out_ref:    (bm, Cout)
    a = jnp.maximum(x_ref[...] * scale_ref[...] + bias_ref[...], 0.0)  # BN + ReLU (f32 VPU)

    # 2x2 average pool == mean of the four contiguous Cin-wide lane groups (VPU adds).
    p = (a[:, 0 * cin:1 * cin] + a[:, 1 * cin:2 * cin] +
         a[:, 2 * cin:3 * cin] + a[:, 3 * cin:4 * cin]) * 0.25

    # 1x1 conv == matmul; cast inputs to the weight dtype (bf16 fast path) with
    # f32 accumulation on the MXU.
    y = jnp.dot(p.astype(w_ref.dtype), w_ref[...], preferred_element_type=jnp.float32)
    out_ref[...] = y.astype(out_ref.dtype)


def _pick_block_rows(m, row_bytes):
    """Rows per grid step.

    Big blocks amortize the ~0.35us/step overhead and reach the HBM roofline;
    cap them so double-buffered in+out blocks stay well inside a v7x TensorCore's
    64 MiB VMEM.  The block count must divide m exactly (full blocks only).
    """
    max_rows = max(8, (16 << 20) // (2 * max(row_bytes, 1)))
    target = min(1024, max_rows)
    if m <= target:
        return m
    nblocks = -(-m // target)
    for d in range(nblocks, m + 1):
        if m % d == 0 and (m // d) % 8 == 0:
            return m // d
    return m  # no suitable divisor: fall back to a single block


def transition_forward(x_nchw, gamma, beta, running_mean, running_var, conv_w,
                       eps=1e-5, matmul_dtype=jnp.bfloat16):
    N, Cin, H, W = x_nchw.shape
    Cout = conv_w.shape[0]
    Ho, Wo = H // 2, W // 2
    M = N * Ho * Wo

    # TODO(synk): training-mode BatchNorm (batch statistics + running-stat update)
    # is not implemented; running stats are folded (eval / inference mode).
    scale = (gamma / jnp.sqrt(running_var + eps)).astype(jnp.float32)
    bias = (beta - running_mean * scale).astype(jnp.float32)
    scale4 = jnp.tile(scale, 4).reshape(1, 4 * Cin)
    bias4 = jnp.tile(bias, 4).reshape(1, 4 * Cin)

    # One wrapper relayout pass (replaces the plain NCHW->NHWC transpose of v1):
    # group each output pixel's 2x2 input window into 4 contiguous Cin-wide column
    # groups so the in-kernel pool is pure unit-stride lane arithmetic.
    # (PyTorch avg_pool2d(2) drops odd trailing rows/cols, hence the crop.)
    x = x_nchw[:, :, :2 * Ho, :2 * Wo].astype(jnp.float32)
    xg = (x.reshape(N, Cin, Ho, 2, Wo, 2)
           .transpose(0, 2, 4, 3, 5, 1)            # (N, Ho, Wo, dy, dx, Cin)
           .reshape(M, 4 * Cin))

    # Conv2d weight (Cout, Cin, 1, 1) -> (Cin, Cout); bf16 for the MXU fast path.
    w = conv_w.reshape(Cout, Cin).T.astype(matmul_dtype)

    bm = _pick_block_rows(M, row_bytes=4 * (4 * Cin + Cout))

    out2d = pl.pallas_call(
        functools.partial(_transition_kernel, cin=Cin),
        out_shape=jax.ShapeDtypeStruct((M, Cout), jnp.float32),
        grid=(M // bm,),
        in_specs=[
            pl.BlockSpec((bm, 4 * Cin), lambda i: (i, 0)),
            pl.BlockSpec((1, 4 * Cin), lambda i: (0, 0)),   # grid-invariant (tiny)
            pl.BlockSpec((1, 4 * Cin), lambda i: (0, 0)),   # grid-invariant (tiny)
            pl.BlockSpec((Cin, Cout), lambda i: (0, 0)),    # grid-invariant (tiny)
        ],
        out_specs=pl.BlockSpec((bm, Cout), lambda i: (i, 0)),
        compiler_params=pltpu.CompilerParams(
            dimension_semantics=("parallel",),              # row blocks are independent
            vmem_limit_bytes=48 * 1024 * 1024,              # explicit, v7x-safe
        ),
    )(xg, scale4, bias4, w)

    # (N*Ho*Wo, Cout) -> NCHW output.
    return out2d.reshape(N, Ho, Wo, Cout).transpose(0, 3, 1, 2)


def _reference(x_nchw, gamma, beta, running_mean, running_var, conv_w, eps=1e-5):
    # Pure-JAX reference of the same forward (eval-mode BN), conv-then-pool order.
    s = gamma / jnp.sqrt(running_var + eps)
    b = beta - running_mean * s
    xn = x_nchw * s[None, :, None, None] + b[None, :, None, None]
    a = jnp.maximum(xn, 0.0)
    w = conv_w.reshape(conv_w.shape[0], conv_w.shape[1])            # (Cout, Cin)
    y = jnp.einsum('nchw,oc->nohw', a, w)
    N, Co, H, W = y.shape
    y = y.reshape(N, Co, H // 2, 2, W // 2, 2).mean(axis=(3, 5))
    return y


if __name__ == "__main__":
    # Shapes: Transition(nChannels=4, nOutChannels=8), input (2, 4, 16, 16)
    N, Cin, Cout, H, W = 2, 4, 8, 16, 16
    key = jax.random.PRNGKey(0)
    kx, kg, kb, km, kv, kw = jax.random.split(key, 6)

    x = jax.random.normal(kx, (N, Cin, H, W), jnp.float32)
    gamma = jax.random.normal(kg, (Cin,), jnp.float32) * 0.1 + 1.0
    beta = jax.random.normal(kb, (Cin,), jnp.float32) * 0.1
    running_mean = jax.random.normal(km, (Cin,), jnp.float32) * 0.1
    running_var = jnp.abs(jax.random.normal(kv, (Cin,), jnp.float32)) * 0.1 + 1.0
    conv_w = jax.random.normal(kw, (Cout, Cin, 1, 1), jnp.float32) * (2.0 / Cin) ** 0.5

    ref = _reference(x, gamma, beta, running_mean, running_var, conv_w)

    # Exact path (f32 matmul): tight tolerance against the reference.
    out_f32 = transition_forward(x, gamma, beta, running_mean, running_var, conv_w,
                                 matmul_dtype=jnp.float32)
    out_f32 = jax.block_until_ready(out_f32)
    assert out_f32.shape == (N, Cout, H // 2, W // 2), out_f32.shape
    assert jnp.allclose(out_f32, ref, atol=1e-5, rtol=1e-5)

    # Default fast path (bf16 matmul inputs, f32 accumulation): bf16-level tolerance.
    out_bf16 = transition_forward(x, gamma, beta, running_mean, running_var, conv_w)
    out_bf16 = jax.block_until_ready(out_bf16)
    assert out_bf16.shape == (N, Cout, H // 2, W // 2), out_bf16.shape
    assert jnp.allclose(out_bf16, ref, atol=5e-2, rtol=5e-2)

    print("KERNEL_OK")
</pallas_src>

<mosaic_0001>
module attributes {stable_mosaic.version = 11 : i64} {
  func.func @_transition_kernel(%arg0: i32, %arg1: memref<128x16xf32, #tpu.memory_space<vmem>>, %arg2: memref<1x16xf32, #tpu.memory_space<vmem>>, %arg3: memref<1x16xf32, #tpu.memory_space<vmem>>, %arg4: memref<4x8xf32, #tpu.memory_space<vmem>>, %arg5: memref<128x8xf32, #tpu.memory_space<vmem>>) attributes {dimension_semantics = [#tpu.dimension_semantics<parallel>], iteration_bounds = array<i64: 1>, scalar_prefetch = 0 : i64, scratch_operands = 0 : i64, tpu.core_type = #tpu.core_type<tc>, window_params = [{transform_indices = @transform_0, window_bounds = array<i64: 128, 16>}, {pipeline_mode = #tpu.pipeline_mode<synchronous>, transform_indices = @transform_1, window_bounds = array<i64: 1, 16>}, {pipeline_mode = #tpu.pipeline_mode<synchronous>, transform_indices = @transform_2, window_bounds = array<i64: 1, 16>}, {pipeline_mode = #tpu.pipeline_mode<synchronous>, transform_indices = @transform_3, window_bounds = array<i64: 4, 8>}, {transform_indices = @transform_4, window_bounds = array<i64: 128, 8>}]} {
    %c0 = arith.constant 0 : index
    %c0_0 = arith.constant 0 : index
    %0 = vector.load %arg1[%c0, %c0_0] : memref<128x16xf32, #tpu.memory_space<vmem>>, vector<128x16xf32>
    %c0_1 = arith.constant 0 : index
    %c0_2 = arith.constant 0 : index
    %1 = vector.load %arg2[%c0_1, %c0_2] : memref<1x16xf32, #tpu.memory_space<vmem>>, vector<1x16xf32>
    %2 = vector.broadcast %1 : vector<1x16xf32> to vector<128x16xf32>
    %3 = arith.mulf %0, %2 : vector<128x16xf32>
    %c0_3 = arith.constant 0 : index
    %c0_4 = arith.constant 0 : index
    %4 = vector.load %arg3[%c0_3, %c0_4] : memref<1x16xf32, #tpu.memory_space<vmem>>, vector<1x16xf32>
    %5 = vector.broadcast %4 : vector<1x16xf32> to vector<128x16xf32>
    %6 = arith.addf %3, %5 : vector<128x16xf32>
    %cst = arith.constant 0.000000e+00 : f32
    %7 = vector.broadcast %cst : f32 to vector<128x16xf32>
    %8 = arith.maximumf %6, %7 : vector<128x16xf32>
    %9 = vector.extract_strided_slice %8 {offsets = [0, 0], sizes = [128, 4], strides = [1, 1]} : vector<128x16xf32> to vector<128x4xf32>
    %10 = vector.extract_strided_slice %8 {offsets = [0, 4], sizes = [128, 4], strides = [1, 1]} : vector<128x16xf32> to vector<128x4xf32>
    %11 = arith.addf %9, %10 : vector<128x4xf32>
    %12 = vector.extract_strided_slice %8 {offsets = [0, 8], sizes = [128, 4], strides = [1, 1]} : vector<128x16xf32> to vector<128x4xf32>
    %13 = arith.addf %11, %12 : vector<128x4xf32>
    %14 = vector.extract_strided_slice %8 {offsets = [0, 12], sizes = [128, 4], strides = [1, 1]} : vector<128x16xf32> to vector<128x4xf32>
    %15 = arith.addf %13, %14 : vector<128x4xf32>
    %cst_5 = arith.constant 2.500000e-01 : f32
    %16 = vector.broadcast %cst_5 : f32 to vector<128x4xf32>
    %17 = arith.mulf %15, %16 : vector<128x4xf32>
    %c0_6 = arith.constant 0 : index
    %c0_7 = arith.constant 0 : index
    %18 = vector.load %arg4[%c0_6, %c0_7] : memref<4x8xf32, #tpu.memory_space<vmem>>, vector<4x8xf32>
    %cst_8 = arith.constant dense<0.000000e+00> : vector<128x8xf32>
    %19 = tpu.matmul %17, %18, %cst_8 {dimension_numbers = #tpu.dot_dimension_numbers<[1], [0], [0], [1], [0, 0, 1, 1], [], []>} : vector<128x4xf32>, vector<4x8xf32>, vector<128x8xf32> -> vector<128x8xf32>
    %c0_9 = arith.constant 0 : index
    %c0_10 = arith.constant 0 : index
    %20 = vector.load %arg5[%c0_9, %c0_10] : memref<128x8xf32, #tpu.memory_space<vmem>>, vector<128x8xf32>
    tpu.vector_store %arg5[%c0_9, %c0_10], %19 {strides = array<i32>} : memref<128x8xf32, #tpu.memory_space<vmem>>, vector<128x8xf32>,
    return
  }
  func.func @transform_0(%arg0: i32) -> (i32, i32) {
    %c0_i32 = arith.constant 0 : i32
    %c0_i32_0 = arith.constant 0 : i32
    return %arg0, %c0_i32 : i32, i32
  }
  func.func @transform_1(%arg0: i32) -> (i32, i32) {
    %c0_i32 = arith.constant 0 : i32
    %c0_i32_0 = arith.constant 0 : i32
    %c0_i32_1 = arith.constant 0 : i32
    return %c0_i32, %c0_i32_0 : i32, i32
  }
  func.func @transform_2(%arg0: i32) -> (i32, i32) {
    %c0_i32 = arith.constant 0 : i32
    %c0_i32_0 = arith.constant 0 : i32
    %c0_i32_1 = arith.constant 0 : i32
    return %c0_i32, %c0_i32_0 : i32, i32
  }
  func.func @transform_3(%arg0: i32) -> (i32, i32) {
    %c0_i32 = arith.constant 0 : i32
    %c0_i32_0 = arith.constant 0 : i32
    %c0_i32_1 = arith.constant 0 : i32
    return %c0_i32, %c0_i32_0 : i32, i32
  }
  func.func @transform_4(%arg0: i32) -> (i32, i32) {
    %c0_i32 = arith.constant 0 : i32
    %c0_i32_0 = arith.constant 0 : i32
    return %arg0, %c0_i32 : i32, i32
  }
}

</mosaic_0001>

<llo_original>
// kernel: tpu_custom_call.1
$region0: #{tpu_custom_call.1}
  #allocation0 [shape = 'u32[]', space=smem, size = 0x4, offset = 0x4, fixed_abs, tag = 'smem constant byte address 0x4 - core index']
  #allocation1 [shape = 'u32[144,128]{1,0:T(1,128)}', space=vmem, size = 0x12000, scoped, tag = 'internal scratch']
  %s0 = inlined_call_operand.vmem [shape: f32[128,16], index: 0, kind: input, shape index: {}]
  %s1 = inlined_call_operand.vmem [shape: f32[1,16], index: 1, kind: input, shape index: {}]
  %s2 = inlined_call_operand.vmem [shape: f32[1,16], index: 2, kind: input, shape index: {}]
  %s3 = inlined_call_operand.vmem [shape: f32[4,8], index: 3, kind: input, shape index: {}]
  %s4 = inlined_call_operand.vmem [shape: f32[128,8], index: 4, kind: output, shape index: {}]
  %s5 = sld [smem:[#allocation0]]
  $region26: #{tpu_custom_call.1} parent=0
    _
  %s7 = ssub.s32 1, %s5
  %s8 = scalar_select 0, %s7, %s5
  // Predicated region
  $region2: #{tpu_custom_call.1} parent=0 // pred_check
    _
  $region3: #{tpu_custom_call.1} parent=0 // pred_check_branch
    %10 = sbr.rel (0) target = $region5
  $region4: #{tpu_custom_call.1} parent=0 // pred_region
    _
  $region5: #{tpu_custom_call.1} parent=0 // pred_fallthru
    _
  // Predicated region
  $region6: #{tpu_custom_call.1} parent=0 // pred_check
    _
  $region7: #{tpu_custom_call.1} parent=0 // pred_check_branch
    %12 = sbr.rel (0) target = $region9
  $region8: #{tpu_custom_call.1} parent=0 // pred_region
    _
  $region9: #{tpu_custom_call.1} parent=0 // pred_fallthru
    _
  // Predicated region
  $region10: #{tpu_custom_call.1} parent=0 // pred_check
    _
  $region11: #{tpu_custom_call.1} parent=0 // pred_check_branch
    %14 = sbr.rel (0) target = $region13
  $region12: #{tpu_custom_call.1} parent=0 // pred_region
    _
  $region13: #{tpu_custom_call.1} parent=0 // pred_fallthru
    _
  // Predicated region
  $region14: #{tpu_custom_call.1} parent=0 // pred_check
    _
  $region15: #{tpu_custom_call.1} parent=0 // pred_check_branch
    %16 = sbr.rel (0) target = $region17
  $region16: #{tpu_custom_call.1} parent=0 // pred_region
    _
  $region17: #{tpu_custom_call.1} parent=0 // pred_fallthru
    _
  %v17 = vld [vmem:[%s0] sm:$0xff]
  %v18 = vld [vmem:[%s0 + $0x8] sm:$0xff]
  %v19 = vld [vmem:[%s0 + $0x10] sm:$0xff]
  %v20 = vld [vmem:[%s0 + $0x18] sm:$0xff]
  %v21 = vld [vmem:[%s0 + $0x20] sm:$0xff]
  %v22 = vld [vmem:[%s0 + $0x28] sm:$0xff]
  %v23 = vld [vmem:[%s0 + $0x30] sm:$0xff]
  %v24 = vld [vmem:[%s0 + $0x38] sm:$0xff]
  %v25 = vld [vmem:[%s0 + $0x40] sm:$0xff]
  %v26 = vld [vmem:[%s0 + $0x48] sm:$0xff]
  %v27 = vld [vmem:[%s0 + $0x50] sm:$0xff]
  %v28 = vld [vmem:[%s0 + $0x58] sm:$0xff]
  %v29 = vld [vmem:[%s0 + $0x60] sm:$0xff]
  %v30 = vld [vmem:[%s0 + $0x68] sm:$0xff]
  %v31 = vld [vmem:[%s0 + $0x70] sm:$0xff]
  %v32 = vld [vmem:[%s0 + $0x78] sm:$0xff]
  %v33 = vld [vmem:[%s1] sm:$0x1]
  %v35 = vlaneseq
  %v36 = vshrl.u32 %v35, 7
  %v37 = vsub.s32 0, %v36
  %v38 = vrot.slane %v33, %v37
  %v40 = vmul.f32 %v17, %v38
  %v41 = vmul.f32 %v18, %v38
  %v42 = vmul.f32 %v19, %v38
  %v43 = vmul.f32 %v20, %v38
  %v44 = vmul.f32 %v21, %v38
  %v45 = vmul.f32 %v22, %v38
  %v46 = vmul.f32 %v23, %v38
  %v47 = vmul.f32 %v24, %v38
  %v48 = vmul.f32 %v25, %v38
  %v49 = vmul.f32 %v26, %v38
  %v50 = vmul.f32 %v27, %v38
  %v51 = vmul.f32 %v28, %v38
  %v52 = vmul.f32 %v29, %v38
  %v53 = vmul.f32 %v30, %v38
  %v54 = vmul.f32 %v31, %v38
  %v55 = vmul.f32 %v32, %v38
  %v56 = vld [vmem:[%s2] sm:$0x1]
  %v58 = vlaneseq
  %v59 = vshrl.u32 %v58, 7
  %v60 = vsub.s32 0, %v59
  %v61 = vrot.slane %v56, %v60
  %v63 = vadd.f32 %v40, %v61
  %v64 = vadd.f32 %v41, %v61
  %v65 = vadd.f32 %v42, %v61
  %v66 = vadd.f32 %v43, %v61
  %v67 = vadd.f32 %v44, %v61
  %v68 = vadd.f32 %v45, %v61
  %v69 = vadd.f32 %v46, %v61
  %v70 = vadd.f32 %v47, %v61
  %v71 = vadd.f32 %v48, %v61
  %v72 = vadd.f32 %v49, %v61
  %v73 = vadd.f32 %v50, %v61
  %v74 = vadd.f32 %v51, %v61
  %v75 = vadd.f32 %v52, %v61
  %v76 = vadd.f32 %v53, %v61
  %v77 = vadd.f32 %v54, %v61
  %v78 = vadd.f32 %v55, %v61
  %v79 = vmax.f32 %v63, 0.0
  %v80 = vmax.f32 %v64, 0.0
  %v81 = vmax.f32 %v65, 0.0
  %v82 = vmax.f32 %v66, 0.0
  %v83 = vmax.f32 %v67, 0.0
  %v84 = vmax.f32 %v68, 0.0
  %v85 = vmax.f32 %v69, 0.0
  %v86 = vmax.f32 %v70, 0.0
  %v87 = vmax.f32 %v71, 0.0
  %v88 = vmax.f32 %v72, 0.0
  %v89 = vmax.f32 %v73, 0.0
  %v90 = vmax.f32 %v74, 0.0
  %v91 = vmax.f32 %v75, 0.0
  %v92 = vmax.f32 %v76, 0.0
  %v93 = vmax.f32 %v77, 0.0
  %v94 = vmax.f32 %v78, 0.0
  %111 = vrot.lane.b32.xlu0 %v79, 124
  %v112 = vpop.permute.xlu0 %111
  %113 = vrot.lane.b32.xlu0 %v80, 124
  %v114 = vpop.permute.xlu0 %113
  %115 = vrot.lane.b32.xlu0 %v81, 124
  %v116 = vpop.permute.xlu0 %115
  %117 = vrot.lane.b32.xlu0 %v82, 124
  %v118 = vpop.permute.xlu0 %117
  %119 = vrot.lane.b32.xlu0 %v83, 124
  %v120 = vpop.permute.xlu0 %119
  %121 = vrot.lane.b32.xlu0 %v84, 124
  %v122 = vpop.permute.xlu0 %121
  %123 = vrot.lane.b32.xlu0 %v85, 124
  %v124 = vpop.permute.xlu0 %123
  %125 = vrot.lane.b32.xlu0 %v86, 124
  %v126 = vpop.permute.xlu0 %125
  %127 = vrot.lane.b32.xlu0 %v87, 124
  %v128 = vpop.permute.xlu0 %127
  %129 = vrot.lane.b32.xlu0 %v88, 124
  %v130 = vpop.permute.xlu0 %129
  %131 = vrot.lane.b32.xlu0 %v89, 124
  %v132 = vpop.permute.xlu0 %131
  %133 = vrot.lane.b32.xlu0 %v90, 124
  %v134 = vpop.permute.xlu0 %133
  %135 = vrot.lane.b32.xlu0 %v91, 124
  %v136 = vpop.permute.xlu0 %135
  %137 = vrot.lane.b32.xlu0 %v92, 124
  %v138 = vpop.permute.xlu0 %137
  %139 = vrot.lane.b32.xlu0 %v93, 124
  %v140 = vpop.permute.xlu0 %139
  %141 = vrot.lane.b32.xlu0 %v94, 124
  %v142 = vpop.permute.xlu0 %141
  %v159 = vadd.f32 %v79, %v112
  %v160 = vadd.f32 %v80, %v114
  %v161 = vadd.f32 %v81, %v116
  %v162 = vadd.f32 %v82, %v118
  %v163 = vadd.f32 %v83, %v120
  %v164 = vadd.f32 %v84, %v122
  %v165 = vadd.f32 %v85, %v124
  %v166 = vadd.f32 %v86, %v126
  %v167 = vadd.f32 %v87, %v128
  %v168 = vadd.f32 %v88, %v130
  %v169 = vadd.f32 %v89, %v132
  %v170 = vadd.f32 %v90, %v134
  %v171 = vadd.f32 %v91, %v136
  %v172 = vadd.f32 %v92, %v138
  %v173 = vadd.f32 %v93, %v140
  %v174 = vadd.f32 %v94, %v142
  %175 = vrot.lane.b32.xlu0 %v79, 120
  %v176 = vpop.permute.xlu0 %175
  %177 = vrot.lane.b32.xlu0 %v80, 120
  %v178 = vpop.permute.xlu0 %177
  %179 = vrot.lane.b32.xlu0 %v81, 120
  %v180 = vpop.permute.xlu0 %179
  %181 = vrot.lane.b32.xlu0 %v82, 120
  %v182 = vpop.permute.xlu0 %181
  %183 = vrot.lane.b32.xlu0 %v83, 120
  %v184 = vpop.permute.xlu0 %183
  %185 = vrot.lane.b32.xlu0 %v84, 120
  %v186 = vpop.permute.xlu0 %185
  %187 = vrot.lane.b32.xlu0 %v85, 120
  %v188 = vpop.permute.xlu0 %187
  %189 = vrot.lane.b32.xlu0 %v86, 120
  %v190 = vpop.permute.xlu0 %189
  %191 = vrot.lane.b32.xlu0 %v87, 120
  %v192 = vpop.permute.xlu0 %191
  %193 = vrot.lane.b32.xlu0 %v88, 120
  %v194 = vpop.permute.xlu0 %193
  %195 = vrot.lane.b32.xlu0 %v89, 120
  %v196 = vpop.permute.xlu0 %195
  %197 = vrot.lane.b32.xlu0 %v90, 120
  %v198 = vpop.permute.xlu0 %197
  %199 = vrot.lane.b32.xlu0 %v91, 120
  %v200 = vpop.permute.xlu0 %199
  %201 = vrot.lane.b32.xlu0 %v92, 120
  %v202 = vpop.permute.xlu0 %201
  %203 = vrot.lane.b32.xlu0 %v93, 120
  %v204 = vpop.permute.xlu0 %203
  %205 = vrot.lane.b32.xlu0 %v94, 120
  %v206 = vpop.permute.xlu0 %205
  %v223 = vadd.f32 %v159, %v176
  %v224 = vadd.f32 %v160, %v178
  %v225 = vadd.f32 %v161, %v180
  %v226 = vadd.f32 %v162, %v182
  %v227 = vadd.f32 %v163, %v184
  %v228 = vadd.f32 %v164, %v186
  %v229 = vadd.f32 %v165, %v188
  %v230 = vadd.f32 %v166, %v190
  %v231 = vadd.f32 %v167, %v192
  %v232 = vadd.f32 %v168, %v194
  %v233 = vadd.f32 %v169, %v196
  %v234 = vadd.f32 %v170, %v198
  %v235 = vadd.f32 %v171, %v200
  %v236 = vadd.f32 %v172, %v202
  %v237 = vadd.f32 %v173, %v204
  %v238 = vadd.f32 %v174, %v206
  %239 = vrot.lane.b32.xlu0 %v79, 116
  %v240 = vpop.permute.xlu0 %239
  %241 = vrot.lane.b32.xlu0 %v80, 116
  %v242 = vpop.permute.xlu0 %241
  %243 = vrot.lane.b32.xlu0 %v81, 116
  %v244 = vpop.permute.xlu0 %243
  %245 = vrot.lane.b32.xlu0 %v82, 116
  %v246 = vpop.permute.xlu0 %245
  %247 = vrot.lane.b32.xlu0 %v83, 116
  %v248 = vpop.permute.xlu0 %247
  %249 = vrot.lane.b32.xlu0 %v84, 116
  %v250 = vpop.permute.xlu0 %249
  %251 = vrot.lane.b32.xlu0 %v85, 116
  %v252 = vpop.permute.xlu0 %251
  %253 = vrot.lane.b32.xlu0 %v86, 116
  %v254 = vpop.permute.xlu0 %253
  %255 = vrot.lane.b32.xlu0 %v87, 116
  %v256 = vpop.permute.xlu0 %255
  %257 = vrot.lane.b32.xlu0 %v88, 116
  %v258 = vpop.permute.xlu0 %257
  %259 = vrot.lane.b32.xlu0 %v89, 116
  %v260 = vpop.permute.xlu0 %259
  %261 = vrot.lane.b32.xlu0 %v90, 116
  %v262 = vpop.permute.xlu0 %261
  %263 = vrot.lane.b32.xlu0 %v91, 116
  %v264 = vpop.permute.xlu0 %263
  %265 = vrot.lane.b32.xlu0 %v92, 116
  %v266 = vpop.permute.xlu0 %265
  %267 = vrot.lane.b32.xlu0 %v93, 116
  %v268 = vpop.permute.xlu0 %267
  %269 = vrot.lane.b32.xlu0 %v94, 116
  %v270 = vpop.permute.xlu0 %269
  %v287 = vadd.f32 %v223, %v240
  %v288 = vadd.f32 %v224, %v242
  %v289 = vadd.f32 %v225, %v244
  %v290 = vadd.f32 %v226, %v246
  %v291 = vadd.f32 %v227, %v248
  %v292 = vadd.f32 %v228, %v250
  %v293 = vadd.f32 %v229, %v252
  %v294 = vadd.f32 %v230, %v254
  %v295 = vadd.f32 %v231, %v256
  %v296 = vadd.f32 %v232, %v258
  %v297 = vadd.f32 %v233, %v260
  %v298 = vadd.f32 %v234, %v262
  %v299 = vadd.f32 %v235, %v264
  %v300 = vadd.f32 %v236, %v266
  %v301 = vadd.f32 %v237, %v268
  %v302 = vadd.f32 %v238, %v270
  %v303 = vmul.f32 %v287, 0.25
  %v304 = vmul.f32 %v288, 0.25
  %v305 = vmul.f32 %v289, 0.25
  %v306 = vmul.f32 %v290, 0.25
  %v307 = vmul.f32 %v291, 0.25
  %v308 = vmul.f32 %v292, 0.25
  %v309 = vmul.f32 %v293, 0.25
  %v310 = vmul.f32 %v294, 0.25
  %v311 = vmul.f32 %v295, 0.25
  %v312 = vmul.f32 %v296, 0.25
  %v313 = vmul.f32 %v297, 0.25
  %v314 = vmul.f32 %v298, 0.25
  %v315 = vmul.f32 %v299, 0.25
  %v316 = vmul.f32 %v300, 0.25
  %v317 = vmul.f32 %v301, 0.25
  %v318 = vmul.f32 %v302, 0.25
  %v319 = vld [vmem:[%s3] sm:$0xf]
  %vm320 = vcmask 31744
  %v322 = vsel %vm320, %v303, 0
  %v325 = vsel %vm320, %v304, 0
  %v328 = vsel %vm320, %v305, 0
  %v331 = vsel %vm320, %v306, 0
  %v334 = vsel %vm320, %v307, 0
  %v337 = vsel %vm320, %v308, 0
  %v340 = vsel %vm320, %v309, 0
  %v343 = vsel %vm320, %v310, 0
  %v346 = vsel %vm320, %v311, 0
  %v349 = vsel %vm320, %v312, 0
  %v352 = vsel %vm320, %v313, 0
  %v355 = vsel %vm320, %v314, 0
  %v358 = vsel %vm320, %v315, 0
  %v361 = vsel %vm320, %v316, 0
  %v364 = vsel %vm320, %v317, 0
  %v367 = vsel %vm320, %v318, 0
  %vm369 = vcmask 1043456
  %v371 = vsel %vm369, %v319, 0
  %373 = vmatprep.subr.mxu0 0.0
  %374 = vmatpush1.msra.mxu0 %v371
  %375 = vmatprep.subr.mxu0 0.0
  %376 = vmatpush1.msra.mxu0 0.0
  %377 = vmatprep.subr.mxu0 0.0
  %378 = vmatpush1.msra.mxu0 0.0
  %379 = vmatprep.subr.mxu0 0.0
  %380 = vmatpush1.msra.mxu0 0.0
  %381 = vmatprep.subr.mxu0 0.0
  %382 = vmatpush1.msra.mxu0 0.0
  %383 = vmatprep.subr.mxu0 0.0
  %384 = vmatpush1.msra.mxu0 0.0
  %385 = vmatprep.subr.mxu0 0.0
  %386 = vmatpush1.msra.mxu0 0.0
  %387 = vmatprep.subr.mxu0 0.0
  %388 = vmatpush1.msra.mxu0 0.0
  %389 = vmatprep.subr.mxu0 0.0
  %390 = vmatpush1.msra.mxu0 0.0
  %391 = vmatprep.subr.mxu0 0.0
  %392 = vmatpush1.msra.mxu0 0.0
  %393 = vmatprep.subr.mxu0 0.0
  %394 = vmatpush1.msra.mxu0 0.0
  %395 = vmatprep.subr.mxu0 0.0
  %396 = vmatpush1.msra.mxu0 0.0
  %397 = vmatprep.subr.mxu0 0.0
  %398 = vmatpush1.msra.mxu0 0.0
  %399 = vmatprep.subr.mxu0 0.0
  %400 = vmatpush1.msra.mxu0 0.0
  %401 = vmatprep.subr.mxu0 0.0
  %402 = vmatpush1.msra.mxu0 0.0
  %403 = vmatprep.subr.mxu0 0.0
  %404 = vmatpush1.msra.mxu0 0.0
  %405 = vmatprep.subr.mxu0 0.0
  %406 = vmatpush1.msra.mxu0 0.0
  %407 = vmatprep.subr.mxu0 0.0
  %408 = vmatpush1.msra.mxu0 0.0
  %409 = vmatprep.subr.mxu0 0.0
  %410 = vmatpush1.msra.mxu0 0.0
  %411 = vmatprep.subr.mxu0 0.0
  %412 = vmatpush1.msra.mxu0 0.0
  %413 = vmatprep.subr.mxu0 0.0
  %414 = vmatpush1.msra.mxu0 0.0
  %415 = vmatprep.subr.mxu0 0.0
  %416 = vmatpush1.msra.mxu0 0.0
  %417 = vmatprep.subr.mxu0 0.0
  %418 = vmatpush1.msra.mxu0 0.0
  %419 = vmatprep.subr.mxu0 0.0
  %420 = vmatpush1.msra.mxu0 0.0
  %421 = vmatprep.subr.mxu0 0.0
  %422 = vmatpush1.msra.mxu0 0.0
  %423 = vmatprep.subr.mxu0 0.0
  %424 = vmatpush1.msra.mxu0 0.0
  %425 = vmatprep.subr.mxu0 0.0
  %426 = vmatpush1.msra.mxu0 0.0
  %427 = vmatprep.subr.mxu0 0.0
  %428 = vmatpush1.msra.mxu0 0.0
  %429 = vmatprep.subr.mxu0 0.0
  %430 = vmatpush1.msra.mxu0 0.0
  %431 = vmatprep.subr.mxu0 0.0
  %432 = vmatpush1.msra.mxu0 0.0
  %433 = vmatprep.subr.mxu0 0.0
  %434 = vmatpush1.msra.mxu0 0.0
  %435 = vmatprep.subr.mxu0 0.0
  %436 = vmatpush1.msra.mxu0 0.0
  %437 = vmatprep.mubr.f32.mxu0 0.0
  %438 = vmatmul.mubr.f32.gmra.mrb[0].mxu0 %v322
  %v439 = vpop.f32.mrb[0].mxu0
  %v440 = vadd.f32 0.0, %v439
  %v441 = vpop.f32.mrb[0].mxu0
  %442 = vmatprep.mubr.f32.mxu0 0.0
  %443 = vmatmul.mubr.f32.gmra.mrb[0].mxu0 %v325
  %v444 = vpop.f32.mrb[0].mxu0
  %v445 = vadd.f32 0.0, %v444
  %v446 = vpop.f32.mrb[0].mxu0
  %447 = vmatprep.mubr.f32.mxu0 0.0
  %448 = vmatmul.mubr.f32.gmra.mrb[0].mxu0 %v328
  %v449 = vpop.f32.mrb[0].mxu0
  %v450 = vadd.f32 0.0, %v449
  %v451 = vpop.f32.mrb[0].mxu0
  %452 = vmatprep.mubr.f32.mxu0 0.0
  %453 = vmatmul.mubr.f32.gmra.mrb[0].mxu0 %v331
  %v454 = vpop.f32.mrb[0].mxu0
  %v455 = vadd.f32 0.0, %v454
  %v456 = vpop.f32.mrb[0].mxu0
  %457 = vmatprep.mubr.f32.mxu0 0.0
  %458 = vmatmul.mubr.f32.gmra.mrb[0].mxu0 %v334
  %v459 = vpop.f32.mrb[0].mxu0
  %v460 = vadd.f32 0.0, %v459
  %v461 = vpop.f32.mrb[0].mxu0
  %462 = vmatprep.mubr.f32.mxu0 0.0
  %463 = vmatmul.mubr.f32.gmra.mrb[0].mxu0 %v337
  %v464 = vpop.f32.mrb[0].mxu0
  %v465 = vadd.f32 0.0, %v464
  %v466 = vpop.f32.mrb[0].mxu0
  %467 = vmatprep.mubr.f32.mxu0 0.0
  %468 = vmatmul.mubr.f32.gmra.mrb[0].mxu0 %v340
  %v469 = vpop.f32.mrb[0].mxu0
  %v470 = vadd.f32 0.0, %v469
  %v471 = vpop.f32.mrb[0].mxu0
  %472 = vmatprep.mubr.f32.mxu0 0.0
  %473 = vmatmul.mubr.f32.gmra.mrb[0].mxu0 %v343
  %v474 = vpop.f32.mrb[0].mxu0
  %v475 = vadd.f32 0.0, %v474
  %v476 = vpop.f32.mrb[0].mxu0
  %477 = vmatprep.mubr.f32.mxu0 0.0
  %478 = vmatmul.mubr.f32.gmra.mrb[0].mxu0 %v346
  %v479 = vpop.f32.mrb[0].mxu0
  %v480 = vadd.f32 0.0, %v479
  %v481 = vpop.f32.mrb[0].mxu0
  %482 = vmatprep.mubr.f32.mxu0 0.0
  %483 = vmatmul.mubr.f32.gmra.mrb[0].mxu0 %v349
  %v484 = vpop.f32.mrb[0].mxu0
  %v485 = vadd.f32 0.0, %v484
  %v486 = vpop.f32.mrb[0].mxu0
  %487 = vmatprep.mubr.f32.mxu0 0.0
  %488 = vmatmul.mubr.f32.gmra.mrb[0].mxu0 %v352
  %v489 = vpop.f32.mrb[0].mxu0
  %v490 = vadd.f32 0.0, %v489
  %v491 = vpop.f32.mrb[0].mxu0
  %492 = vmatprep.mubr.f32.mxu0 0.0
  %493 = vmatmul.mubr.f32.gmra.mrb[0].mxu0 %v355
  %v494 = vpop.f32.mrb[0].mxu0
  %v495 = vadd.f32 0.0, %v494
  %v496 = vpop.f32.mrb[0].mxu0
  %497 = vmatprep.mubr.f32.mxu0 0.0
  %498 = vmatmul.mubr.f32.gmra.mrb[0].mxu0 %v358
  %v499 = vpop.f32.mrb[0].mxu0
  %v500 = vadd.f32 0.0, %v499
  %v501 = vpop.f32.mrb[0].mxu0
  %502 = vmatprep.mubr.f32.mxu0 0.0
  %503 = vmatmul.mubr.f32.gmra.mrb[0].mxu0 %v361
  %v504 = vpop.f32.mrb[0].mxu0
  %v505 = vadd.f32 0.0, %v504
  %v506 = vpop.f32.mrb[0].mxu0
  %507 = vmatprep.mubr.f32.mxu0 0.0
  %508 = vmatmul.mubr.f32.gmra.mrb[0].mxu0 %v364
  %v509 = vpop.f32.mrb[0].mxu0
  %v510 = vadd.f32 0.0, %v509
  %v511 = vpop.f32.mrb[0].mxu0
  %512 = vmatprep.mubr.f32.mxu0 0.0
  %513 = vmatmul.mubr.f32.gmra.mrb[0].mxu0 %v367
  %v514 = vpop.f32.mrb[0].mxu0
  %v515 = vadd.f32 0.0, %v514
  %v516 = vpop.f32.mrb[0].mxu0
  %517 = vdwg.mxu0
  %vm518 = vcmask 64512
  %519 = vst.msk [vmem:[%s4] sm:$0xff] %vm518, %v440
  %520 = vst.msk [vmem:[%s4 + $0x8] sm:$0xff] %vm518, %v445
  %521 = vst.msk [vmem:[%s4 + $0x10] sm:$0xff] %vm518, %v450
  %522 = vst.msk [vmem:[%s4 + $0x18] sm:$0xff] %vm518, %v455
  %523 = vst.msk [vmem:[%s4 + $0x20] sm:$0xff] %vm518, %v460
  %524 = vst.msk [vmem:[%s4 + $0x28] sm:$0xff] %vm518, %v465
  %525 = vst.msk [vmem:[%s4 + $0x30] sm:$0xff] %vm518, %v470
  %526 = vst.msk [vmem:[%s4 + $0x38] sm:$0xff] %vm518, %v475
  %527 = vst.msk [vmem:[%s4 + $0x40] sm:$0xff] %vm518, %v480
  %528 = vst.msk [vmem:[%s4 + $0x48] sm:$0xff] %vm518, %v485
  %529 = vst.msk [vmem:[%s4 + $0x50] sm:$0xff] %vm518, %v490
  %530 = vst.msk [vmem:[%s4 + $0x58] sm:$0xff] %vm518, %v495
  %531 = vst.msk [vmem:[%s4 + $0x60] sm:$0xff] %vm518, %v500
  %532 = vst.msk [vmem:[%s4 + $0x68] sm:$0xff] %vm518, %v505
  %533 = vst.msk [vmem:[%s4 + $0x70] sm:$0xff] %vm518, %v510
  %534 = vst.msk [vmem:[%s4 + $0x78] sm:$0xff] %vm518, %v515
  // Predicated region
  $region18: #{tpu_custom_call.1} parent=0 // pred_check
    _
  $region19: #{tpu_custom_call.1} parent=0 // pred_check_branch
    %536 = sbr.rel (0) target = $region21
  $region20: #{tpu_custom_call.1} parent=0 // pred_region
    _
  $region21: #{tpu_custom_call.1} parent=0 // pred_fallthru
    _
  // Predicated region
  $region22: #{tpu_custom_call.1} parent=0 // pred_check
    _
  $region23: #{tpu_custom_call.1} parent=0 // pred_check_branch
    %538 = sbr.rel (0) target = $region25
  $region24: #{tpu_custom_call.1} parent=0 // pred_region
    _
  $region25: #{tpu_custom_call.1} parent=0 // pred_fallthru
    _

</llo_original>
